<compile_context>
chip_gen: v6e
topology: v6e:2x2x1
jax: 0.10.0
libtpu: 0.0.40
codegen_flags: <defaults>
</compile_context>

<pallas_src>
import numpy as np
import jax
import jax.numpy as jnp
from jax.experimental import pallas as pl
from jax.experimental.pallas import tpu as pltpu


S = 32    # sublane-padded row count (covers N=16 nodes and E=24 edges)
L = 128   # lane-dense feature / contraction padding


# ----------------------------------------------------------------------------
# Kernel: one grid step == one branch (0 = node/link, 1 = edge/weight).
# Per branch:  H1 = relu(adj @ H0 @ W1)
#              Z  = adj @ (H1 @ W2)
#              out = sigmoid(lamb * normalize(Z) @ normalize(Z)^T)
# ----------------------------------------------------------------------------
def _ugae_kernel(h0_ref, adj_ref, w1_ref, w2_ref, out_ref):
    f32, bf16 = jnp.float32, jnp.bfloat16
    lamb = jnp.where(pl.program_id(0) == 0, jnp.float32(5.0), jnp.float32(0.1))

    h0 = h0_ref[0]     # [S, L] bf16   (real [n, d_in], zero-padded)
    adj = adj_ref[0]   # [S, S] bf16   (real [n, n], sym-normalized)
    w1 = w1_ref[0]     # [L, L] bf16   (real [d_in, hidden])
    w2 = w2_ref[0]     # [L, L] bf16   (real [hidden, d_out])

    # ---- GCN layer 1: relu((adj @ H0) @ W1) ----
    ah0 = jnp.dot(adj, h0, preferred_element_type=f32)                 # [S, L]
    h1 = jnp.maximum(
        jnp.dot(ah0.astype(bf16), w1, preferred_element_type=f32), 0.0)

    # ---- GCN layer 2 (W2 first so the adj product contracts the narrow dim) ----
    h1w2 = jnp.dot(h1.astype(bf16), w2, preferred_element_type=f32)    # [S, L]
    z = jnp.dot(adj, h1w2.astype(bf16), preferred_element_type=f32)    # [S, L]

    # ---- Decoder: f32 L2-normalize, transpose-free f32 Gram, sigmoid ----
    # Zero-padded rows/cols stay exactly zero, so padding yields sigmoid(0)=0.5
    # garbage only in the region the wrapper slices away.
    eps = jnp.float32(1e-12)
    zn = z * jax.lax.rsqrt(jnp.sum(z * z, axis=-1, keepdims=True) + eps)
    gram = jax.lax.dot_general(zn, zn, (((1,), (1,)), ((), ())),
                               preferred_element_type=f32)             # [S, S]
    out_ref[0] = jax.nn.sigmoid(lamb * gram)


def _pad2(x, rows, cols):
    r, c = x.shape
    return jnp.pad(x, ((0, rows - r), (0, cols - c)))


# ----------------------------------------------------------------------------
# One-time packing of the static operands (adjacencies, weights). Hoisted out
# of the per-call path so the forward only builds the X-dependent H0 slab.
# ----------------------------------------------------------------------------
def prepare_static(gcn_adj, adj_e, adj_n, w1n, w2n, w1e, w2e):
    adjs = jnp.stack([_pad2(gcn_adj, S, S),
                      _pad2(adj_e, S, S)]).astype(jnp.bfloat16)    # [2, S, S]
    w1s = jnp.stack([_pad2(w1n, L, L),
                     _pad2(w1e, L, L)]).astype(jnp.bfloat16)       # [2, L, L]
    w2s = jnp.stack([_pad2(w2n, L, L),
                     _pad2(w2e, L, L)]).astype(jnp.bfloat16)       # [2, L, L]
    lift_t = jnp.asarray(adj_n).T                                  # [E, N] f32
    return adjs, w1s, w2s, lift_t


def ugae_forward(X, lift_t, adjs, w1s, w2s):
    """Fused UGAE forward. Returns (l_pre [N, N], w_pre [E, E])."""
    N = X.shape[0]
    E = lift_t.shape[0]

    # Per-call: incidence lift for the edge branch (tiny f32 XLA matmul),
    # then a single bf16 [2, S, L] H0 slab.
    h0_edge = lift_t @ X                                            # [E, d_in]
    h0 = jnp.stack([_pad2(X, S, L),
                    _pad2(h0_edge, S, L)]).astype(jnp.bfloat16)     # [2, S, L]

    out = pl.pallas_call(
        _ugae_kernel,
        grid=(2,),
        in_specs=[
            pl.BlockSpec((1, S, L), lambda i: (i, 0, 0)),   # H0 (per-branch)
            pl.BlockSpec((1, S, S), lambda i: (i, 0, 0)),   # adjacency (per-branch)
            pl.BlockSpec((1, L, L), lambda i: (i, 0, 0)),   # W1 (per-branch)
            pl.BlockSpec((1, L, L), lambda i: (i, 0, 0)),   # W2 (per-branch)
        ],
        out_specs=pl.BlockSpec((1, S, S), lambda i: (i, 0, 0)),
        out_shape=jax.ShapeDtypeStruct((2, S, S), jnp.float32),
        compiler_params=pltpu.CompilerParams(
            dimension_semantics=("parallel",)),
    )(h0, adjs, w1s, w2s)

    l_pre = out[0, :N, :N]
    w_pre = out[1, :E, :E]
    return l_pre, w_pre


# ----------------------------------------------------------------------------
# Pure-JAX f32 reference (same reconstructed math) for a loose numeric check.
# ----------------------------------------------------------------------------
def ugae_reference(X, gcn_adj, adj_n, adj_e, w1n, w2n, w1e, w2e):
    def gcn(adj, h, w1, w2):
        h1 = jnp.maximum((adj @ h) @ w1, 0.0)
        return adj @ (h1 @ w2)

    def decode(z, lamb):
        zn = z * jax.lax.rsqrt(jnp.sum(z * z, axis=-1, keepdims=True) + 1e-12)
        return jax.nn.sigmoid(lamb * (zn @ zn.T))

    zn_ = gcn(gcn_adj, X, w1n, w2n)
    ze_ = gcn(adj_e, adj_n.T @ X, w1e, w2e)
    return decode(zn_, 5.0), decode(ze_, 0.1)


# ----------------------------------------------------------------------------
# Deterministic synthetic graph + parameters.
# ----------------------------------------------------------------------------
def _sym_norm(a):
    a = a + np.eye(a.shape[0], dtype=np.float32)
    d = a.sum(axis=1)
    d_inv_sqrt = 1.0 / np.sqrt(np.maximum(d, 1e-12))
    return (a * d_inv_sqrt[:, None]) * d_inv_sqrt[None, :]


def build_graph(n_nodes=16, n_extra=8):
    edges = [(i, (i + 1) % n_nodes) for i in range(n_nodes)]
    for k in range(n_extra):
        edges.append((k, (k + n_nodes // 2) % n_nodes))
    E = len(edges)
    A = np.zeros((n_nodes, n_nodes), dtype=np.float32)
    T = np.zeros((n_nodes, E), dtype=np.float32)      # node-edge incidence
    for e, (u, v) in enumerate(edges):
        A[u, v] = 1.0
        A[v, u] = 1.0
        T[u, e] = 1.0
        T[v, e] = 1.0
    Ae = (T.T @ T > 0).astype(np.float32)             # line-graph adjacency
    np.fill_diagonal(Ae, 0.0)
    return (_sym_norm(A).astype(np.float32), T.astype(np.float32),
            _sym_norm(Ae).astype(np.float32))


def init_params(key, input_dim, hidden_dim, output_dim):
    k1, k2, k3, k4 = jax.random.split(key, 4)

    def glorot(k, fan_in, fan_out):
        lim = np.sqrt(6.0 / (fan_in + fan_out))
        return jax.random.uniform(k, (fan_in, fan_out), jnp.float32, -lim, lim)

    return (glorot(k1, input_dim, hidden_dim), glorot(k2, hidden_dim, output_dim),
            glorot(k3, input_dim, hidden_dim), glorot(k4, hidden_dim, output_dim))


if __name__ == "__main__":
    N, INPUT_DIM, HIDDEN_DIM, OUTPUT_DIM = 16, 8, 32, 16

    gcn_adj_np, adj_n_np, adj_e_np = build_graph(n_nodes=N, n_extra=8)
    E = adj_e_np.shape[0]
    assert N <= S and E <= S and max(INPUT_DIM, HIDDEN_DIM, OUTPUT_DIM) <= L

    key = jax.random.PRNGKey(0)
    kx, kp = jax.random.split(key)
    X = jax.random.normal(kx, (N, INPUT_DIM), dtype=jnp.float32)
    w1n, w2n, w1e, w2e = init_params(kp, INPUT_DIM, HIDDEN_DIM, OUTPUT_DIM)

    gcn_adj = jnp.asarray(gcn_adj_np)
    adj_n = jnp.asarray(adj_n_np)
    adj_e = jnp.asarray(adj_e_np)

    # One-time static packing (outside the per-call path).
    adjs, w1s, w2s, lift_t = prepare_static(gcn_adj, adj_e, adj_n,
                                            w1n, w2n, w1e, w2e)

    forward = jax.jit(ugae_forward)
    l_pre, w_pre = forward(X, lift_t, adjs, w1s, w2s)
    jax.block_until_ready((l_pre, w_pre))

    assert l_pre.shape == (N, N) and w_pre.shape == (E, E)
    assert bool(jnp.all(jnp.isfinite(l_pre))) and bool(jnp.all(jnp.isfinite(w_pre)))

    # Loose check vs. f32 reference (encoder matmuls run bf16 on the MXU).
    l_ref, w_ref = ugae_reference(X, gcn_adj, adj_n, adj_e, w1n, w2n, w1e, w2e)
    assert bool(jnp.max(jnp.abs(l_pre - l_ref)) < 0.1)
    assert bool(jnp.max(jnp.abs(w_pre - w_ref)) < 0.1)

    print("KERNEL_OK")
</pallas_src>

<mosaic_0001>
module attributes {stable_mosaic.version = 11 : i64} {
  func.func @_ugae_kernel(%arg0: i32, %arg1: memref<1x32x128xbf16, #tpu.memory_space<vmem>>, %arg2: memref<1x32x32xbf16, #tpu.memory_space<vmem>>, %arg3: memref<1x128x128xbf16, #tpu.memory_space<vmem>>, %arg4: memref<1x128x128xbf16, #tpu.memory_space<vmem>>, %arg5: memref<1x32x32xf32, #tpu.memory_space<vmem>>) attributes {dimension_semantics = [#tpu.dimension_semantics<parallel>], iteration_bounds = array<i64: 2>, scalar_prefetch = 0 : i64, scratch_operands = 0 : i64, tpu.core_type = #tpu.core_type<tc>, window_params = [{transform_indices = @transform_0, window_bounds = array<i64: 1, 32, 128>}, {transform_indices = @transform_1, window_bounds = array<i64: 1, 32, 32>}, {transform_indices = @transform_2, window_bounds = array<i64: 1, 128, 128>}, {transform_indices = @transform_3, window_bounds = array<i64: 1, 128, 128>}, {transform_indices = @transform_4, window_bounds = array<i64: 1, 32, 32>}]} {
    %c0_i32 = arith.constant 0 : i32
    %0 = arith.cmpi eq, %arg0, %c0_i32 : i32
    %cst = arith.constant 5.000000e+00 : f32
    %cst_0 = arith.constant 1.000000e-01 : f32
    %1 = arith.select %0, %cst, %cst_0 : f32
    %c0 = arith.constant 0 : index
    %c0_1 = arith.constant 0 : index
    %c0_2 = arith.constant 0 : index
    %2 = vector.load %arg1[%c0, %c0_1, %c0_2] : memref<1x32x128xbf16, #tpu.memory_space<vmem>>, vector<1x32x128xbf16>
    %3 = vector.shape_cast %2 : vector<1x32x128xbf16> to vector<32x128xbf16>
    %c0_3 = arith.constant 0 : index
    %c0_4 = arith.constant 0 : index
    %c0_5 = arith.constant 0 : index
    %4 = vector.load %arg2[%c0_3, %c0_4, %c0_5] : memref<1x32x32xbf16, #tpu.memory_space<vmem>>, vector<1x32x32xbf16>
    %5 = vector.shape_cast %4 : vector<1x32x32xbf16> to vector<32x32xbf16>
    %c0_6 = arith.constant 0 : index
    %c0_7 = arith.constant 0 : index
    %c0_8 = arith.constant 0 : index
    %6 = vector.load %arg3[%c0_6, %c0_7, %c0_8] : memref<1x128x128xbf16, #tpu.memory_space<vmem>>, vector<1x128x128xbf16>
    %7 = vector.shape_cast %6 : vector<1x128x128xbf16> to vector<128x128xbf16>
    %c0_9 = arith.constant 0 : index
    %c0_10 = arith.constant 0 : index
    %c0_11 = arith.constant 0 : index
    %8 = vector.load %arg4[%c0_9, %c0_10, %c0_11] : memref<1x128x128xbf16, #tpu.memory_space<vmem>>, vector<1x128x128xbf16>
    %9 = vector.shape_cast %8 : vector<1x128x128xbf16> to vector<128x128xbf16>
    %cst_12 = arith.constant dense<0.000000e+00> : vector<32x128xf32>
    %10 = tpu.matmul %5, %3, %cst_12 {dimension_numbers = #tpu.dot_dimension_numbers<[1], [0], [0], [1], [0, 0, 1, 1], [], []>} : vector<32x32xbf16>, vector<32x128xbf16>, vector<32x128xf32> -> vector<32x128xf32>
    %11 = arith.truncf %10 : vector<32x128xf32> to vector<32x128xbf16>
    %cst_13 = arith.constant dense<0.000000e+00> : vector<32x128xf32>
    %12 = tpu.matmul %11, %7, %cst_13 {dimension_numbers = #tpu.dot_dimension_numbers<[1], [0], [0], [1], [0, 0, 1, 1], [], []>} : vector<32x128xbf16>, vector<128x128xbf16>, vector<32x128xf32> -> vector<32x128xf32>
    %cst_14 = arith.constant 0.000000e+00 : f32
    %13 = vector.broadcast %cst_14 : f32 to vector<32x128xf32>
    %14 = arith.maximumf %12, %13 : vector<32x128xf32>
    %15 = arith.truncf %14 : vector<32x128xf32> to vector<32x128xbf16>
    %cst_15 = arith.constant dense<0.000000e+00> : vector<32x128xf32>
    %16 = tpu.matmul %15, %9, %cst_15 {dimension_numbers = #tpu.dot_dimension_numbers<[1], [0], [0], [1], [0, 0, 1, 1], [], []>} : vector<32x128xbf16>, vector<128x128xbf16>, vector<32x128xf32> -> vector<32x128xf32>
    %17 = arith.truncf %16 : vector<32x128xf32> to vector<32x128xbf16>
    %cst_16 = arith.constant dense<0.000000e+00> : vector<32x128xf32>
    %18 = tpu.matmul %5, %17, %cst_16 {dimension_numbers = #tpu.dot_dimension_numbers<[1], [0], [0], [1], [0, 0, 1, 1], [], []>} : vector<32x32xbf16>, vector<32x128xbf16>, vector<32x128xf32> -> vector<32x128xf32>
    %19 = arith.mulf %18, %18 : vector<32x128xf32>
    %cst_17 = arith.constant dense<0.000000e+00> : vector<32xf32>
    %20 = vector.multi_reduction <add>, %19, %cst_17 [1] : vector<32x128xf32> to vector<32xf32>
    %21 = vector.shape_cast %20 : vector<32xf32> to vector<32x1xf32>
    %cst_18 = arith.constant 9.99999996E-13 : f32
    %22 = vector.broadcast %cst_18 : f32 to vector<32x1xf32>
    %23 = arith.addf %21, %22 : vector<32x1xf32>
    %24 = math.rsqrt %23 : vector<32x1xf32>
    %25 = vector.broadcast %24 : vector<32x1xf32> to vector<32x128xf32>
    %26 = arith.mulf %18, %25 : vector<32x128xf32>
    %cst_19 = arith.constant dense<0.000000e+00> : vector<32x32xf32>
    %27 = tpu.matmul %26, %26, %cst_19 {dimension_numbers = #tpu.dot_dimension_numbers<[1], [1], [0], [0], [0, 0, 1, 0], [], []>} : vector<32x128xf32>, vector<32x128xf32>, vector<32x32xf32> -> vector<32x32xf32>
    %28 = vector.broadcast %1 : f32 to vector<32x32xf32>
    %29 = arith.mulf %28, %27 : vector<32x32xf32>
    %30 = arith.negf %29 : vector<32x32xf32>
    %31 = math.exp %30 : vector<32x32xf32>
    %cst_20 = arith.constant 1.000000e+00 : f32
    %32 = vector.broadcast %cst_20 : f32 to vector<32x32xf32>
    %33 = arith.addf %32, %31 : vector<32x32xf32>
    %34 = arith.divf %32, %33 : vector<32x32xf32>
    %c0_21 = arith.constant 0 : index
    %c0_22 = arith.constant 0 : index
    %c0_23 = arith.constant 0 : index
    %35 = vector.load %arg5[%c0_21, %c0_22, %c0_23] : memref<1x32x32xf32, #tpu.memory_space<vmem>>, vector<1x32x32xf32>
    %36 = vector.shape_cast %35 : vector<1x32x32xf32> to vector<32x32xf32>
    %37 = vector.shape_cast %34 : vector<32x32xf32> to vector<1x32x32xf32>
    tpu.vector_store %arg5[%c0_21, %c0_22, %c0_23], %37 {strides = array<i32>} : memref<1x32x32xf32, #tpu.memory_space<vmem>>, vector<1x32x32xf32>,
    return
  }
  func.func @transform_0(%arg0: i32) -> (i32, i32, i32) {
    %c0_i32 = arith.constant 0 : i32
    %c0_i32_0 = arith.constant 0 : i32
    %c0_i32_1 = arith.constant 0 : i32
    return %arg0, %c0_i32, %c0_i32_0 : i32, i32, i32
  }
  func.func @transform_1(%arg0: i32) -> (i32, i32, i32) {
    %c0_i32 = arith.constant 0 : i32
    %c0_i32_0 = arith.constant 0 : i32
    %c0_i32_1 = arith.constant 0 : i32
    return %arg0, %c0_i32, %c0_i32_0 : i32, i32, i32
  }
  func.func @transform_2(%arg0: i32) -> (i32, i32, i32) {
    %c0_i32 = arith.constant 0 : i32
    %c0_i32_0 = arith.constant 0 : i32
    %c0_i32_1 = arith.constant 0 : i32
    return %arg0, %c0_i32, %c0_i32_0 : i32, i32, i32
  }
  func.func @transform_3(%arg0: i32) -> (i32, i32, i32) {
    %c0_i32 = arith.constant 0 : i32
    %c0_i32_0 = arith.constant 0 : i32
    %c0_i32_1 = arith.constant 0 : i32
    return %arg0, %c0_i32, %c0_i32_0 : i32, i32, i32
  }
  func.func @transform_4(%arg0: i32) -> (i32, i32, i32) {
    %c0_i32 = arith.constant 0 : i32
    %c0_i32_0 = arith.constant 0 : i32
    %c0_i32_1 = arith.constant 0 : i32
    return %arg0, %c0_i32, %c0_i32_0 : i32, i32, i32
  }
}

</mosaic_0001>

<llo_original>
// kernel: ugae_forward.1
$region0: #{ugae_forward.1}
  #allocation0 [shape = 'u32[]', space=smem, size = 0x4, offset = 0x4, fixed_abs, tag = 'smem constant byte address 0x4 - core index']
  #allocation1 [shape = 'u32[144,128]{1,0:T(1,128)}', space=vmem, size = 0x12000, scoped, tag = 'internal scratch']
  %s0 = inlined_call_operand.vmem [shape: bf16[2,32,128], index: 0, kind: input, shape index: {}]
  %s1 = inlined_call_operand.vmem [shape: bf16[2,32,32], index: 1, kind: input, shape index: {}]
  %s2 = inlined_call_operand.vmem [shape: bf16[2,128,128], index: 2, kind: input, shape index: {}]
  %s3 = inlined_call_operand.hbm [shape: bf16[2,128,128], index: 3, kind: input, shape index: {}]
  %s4 = inlined_call_operand.vmem [shape: f32[2,32,32], index: 4, kind: output, shape index: {}]
  %s5 = sld [smem:[#allocation0]]
  $region53: #{ugae_forward.1} parent=0
    _
  %s7 = ssub.s32 1, %s5
  %s8 = scalar_select 0, %s7, %s5
  $region1: #{ugae_forward.1} parent=0
    #allocation2 [shape = 'u8[65536]{0}', space=vmem, size = 0x10000, scoped, tag = 'input window, operand 3']
    #allocation3 [shape = 's32[2]{0}', space=sflag, size = 0x8, scoped, tag = 'scoped memory for ugae_forward.1']
    %9 = vsyncpa [#allocation3], 0
    %s10 = scalar_lea.sflag [#allocation3], 1
    %11 = vsyncpa %s10, 0
    loop: start=0, step=1, limit=4
    $region2: #{ugae_forward.1} parent=1 // loop_pre_header
      _
    $region3: #{ugae_forward.1} parent=1 // loop_header
      %s13 = sphi 0, %s17
      %p14 = scmp.ge.s32.totalorder %s13, 4
      %s23 = sphi 0, %s25
      %s26 = sphi 0, %s23
      %s27 = sphi 0, %s26
      %s43 = sphi 0, %s27
      %s49 = sphi 0, %s51
      %s52 = sphi 0, %s49
      %s53 = sphi 0, %s52
      %s69 = sphi 0, %s53
      %s75 = sphi 0, %s77
      %s78 = sphi 0, %s75
      %s79 = sphi 0, %s78
      %s95 = sphi 0, %s79
      %s101 = sphi 0, %s103
      %s104 = sphi 0, %s101
      %s105 = sphi 0, %s104
      %s121 = sphi 0, %s105
      %s127 = sphi 0, %s129
      %s130 = sphi 0, %s127
      %s131 = sphi 0, %s130
      %s147 = sphi 0, %s131
    $region4: #{ugae_forward.1} parent=1 // loop_header_branch
      %16 = sbr.rel (%p14) target = $region8
    $region5: #{ugae_forward.1} parent=1 // loop_body
      %s18 = ssub.s32 %s13, 1
      %s19 = ssub.s32 %s13, 2
      %s20 = sadd.s32 %s13, 1
      %s21 = ssub.s32 %s13, %s20
      %p22 = scmp.eq.s32.totalorder %s21, 0
      %s24 = sadd.s32 %s23, 1
      %s25 = scalar_select %p22, %s23, %s24
      %p28 = pneg %p22
      %p29 = scmp.eq.s32.totalorder %s13, 1
      %p30 = por %p28, %p29
      %p31 = scmp.ne.s32.totalorder %s23, %s26
      %p32 = scmp.eq.s32.totalorder %s13, 0
      %p33 = por %p31, %p32
      %p34 = scmp.ne.s32.totalorder %s23, %s26
      %p35 = scmp.eq.s32.totalorder %s18, 1
      %p36 = por %p34, %p35
      %p37 = scmp.ne.s32.totalorder %s26, %s27
      %p38 = scmp.eq.s32.totalorder %s18, 0
      %p39 = por %p37, %p38
      %p40 = scmp.ne.s32.totalorder %s26, %s27
      %p41 = scmp.eq.s32.totalorder %s19, 1
      %p42 = por %p40, %p41
      %p44 = scmp.ne.s32.totalorder %s27, %s43
      %p45 = scmp.eq.s32.totalorder %s19, 0
      %p46 = por %p44, %p45
      %s47 = ssub.s32 %s13, %s20
      %p48 = scmp.eq.s32.totalorder %s47, 0
      %s50 = sadd.s32 %s49, 1
      %s51 = scalar_select %p48, %s49, %s50
      %p54 = pneg %p48
      %p55 = scmp.eq.s32.totalorder %s13, 1
      %p56 = por %p54, %p55
      %p57 = scmp.ne.s32.totalorder %s49, %s52
      %p58 = scmp.eq.s32.totalorder %s13, 0
      %p59 = por %p57, %p58
      %p60 = scmp.ne.s32.totalorder %s49, %s52
      %p61 = scmp.eq.s32.totalorder %s18, 1
      %p62 = por %p60, %p61
      %p63 = scmp.ne.s32.totalorder %s52, %s53
      %p64 = scmp.eq.s32.totalorder %s18, 0
      %p65 = por %p63, %p64
      %p66 = scmp.ne.s32.totalorder %s52, %s53
      %p67 = scmp.eq.s32.totalorder %s19, 1
      %p68 = por %p66, %p67
      %p70 = scmp.ne.s32.totalorder %s53, %s69
      %p71 = scmp.eq.s32.totalorder %s19, 0
      %p72 = por %p70, %p71
      %s73 = ssub.s32 %s13, %s20
      %p74 = scmp.eq.s32.totalorder %s73, 0
      %s76 = sadd.s32 %s75, 1
      %s77 = scalar_select %p74, %s75, %s76
      %p80 = pneg %p74
      %p81 = scmp.eq.s32.totalorder %s13, 1
      %p82 = por %p80, %p81
      %p83 = scmp.ne.s32.totalorder %s75, %s78
      %p84 = scmp.eq.s32.totalorder %s13, 0
      %p85 = por %p83, %p84
      %p86 = scmp.ne.s32.totalorder %s75, %s78
      %p87 = scmp.eq.s32.totalorder %s18, 1
      %p88 = por %p86, %p87
      %p89 = scmp.ne.s32.totalorder %s78, %s79
      %p90 = scmp.eq.s32.totalorder %s18, 0
      %p91 = por %p89, %p90
      %p92 = scmp.ne.s32.totalorder %s78, %s79
      %p93 = scmp.eq.s32.totalorder %s19, 1
      %p94 = por %p92, %p93
      %p96 = scmp.ne.s32.totalorder %s79, %s95
      %p97 = scmp.eq.s32.totalorder %s19, 0
      %p98 = por %p96, %p97
      %s99 = ssub.s32 %s13, %s20
      %p100 = scmp.eq.s32.totalorder %s99, 0
      %s102 = sadd.s32 %s101, 1
      %s103 = scalar_select %p100, %s101, %s102
      %p106 = pneg %p100
      %p107 = scmp.eq.s32.totalorder %s13, 1
      %p108 = por %p106, %p107
      %p109 = scmp.ne.s32.totalorder %s101, %s104
      %p110 = scmp.eq.s32.totalorder %s13, 0
      %p111 = por %p109, %p110
      %p112 = scmp.ne.s32.totalorder %s101, %s104
      %p113 = scmp.eq.s32.totalorder %s18, 1
      %p114 = por %p112, %p113
      %p115 = scmp.ne.s32.totalorder %s104, %s105
      %p116 = scmp.eq.s32.totalorder %s18, 0
      %p117 = por %p115, %p116
      %p118 = scmp.ne.s32.totalorder %s104, %s105
      %p119 = scmp.eq.s32.totalorder %s19, 1
      %p120 = por %p118, %p119
      %p122 = scmp.ne.s32.totalorder %s105, %s121
      %p123 = scmp.eq.s32.totalorder %s19, 0
      %p124 = por %p122, %p123
      %s125 = ssub.s32 %s13, %s20
      %p126 = scmp.eq.s32.totalorder %s125, 0
      %s128 = sadd.s32 %s127, 1
      %s129 = scalar_select %p126, %s127, %s128
      %p132 = pneg %p126
      %p133 = scmp.eq.s32.totalorder %s13, 1
      %p134 = por %p132, %p133
      %p135 = scmp.ne.s32.totalorder %s127, %s130
      %p136 = scmp.eq.s32.totalorder %s13, 0
      %p137 = por %p135, %p136
      %p138 = scmp.ne.s32.totalorder %s127, %s130
      %p139 = scmp.eq.s32.totalorder %s18, 1
      %p140 = por %p138, %p139
      %p141 = scmp.ne.s32.totalorder %s130, %s131
      %p142 = scmp.eq.s32.totalorder %s18, 0
      %p143 = por %p141, %p142
      %p144 = scmp.ne.s32.totalorder %s130, %s131
      %p145 = scmp.eq.s32.totalorder %s19, 1
      %p146 = por %p144, %p145
      %p148 = scmp.ne.s32.totalorder %s131, %s147
      %p149 = scmp.eq.s32.totalorder %s19, 0
      %p150 = por %p148, %p149
      %p151 = scmp.le.s32.totalorder 1, %s13
      %p152 = scmp.lt.s32.totalorder %s13, 3
      %p153 = pnand %p151, %p152
      %p154 = pneg %p153
      // Predicated region
      $region9: #{ugae_forward.1} parent=5 // pred_check
        _
      $region10: #{ugae_forward.1} parent=5 // pred_check_branch
        %156 = sbr.rel (%p153) target = $region12
      $region11: #{ugae_forward.1} parent=5 // pred_region
        %s157 = ssub.s32 %s13, 1
      $region12: #{ugae_forward.1} parent=5 // pred_fallthru
        _
      %p158 = scmp.lt.s32.totalorder %s13, 2
      // Predicated region
      $region13: #{ugae_forward.1} parent=5 // pred_check
        %p159 = pneg %p158
      $region14: #{ugae_forward.1} parent=5 // pred_check_branch
        %161 = sbr.rel (%p159) target = $region16
      $region15: #{ugae_forward.1} parent=5 // pred_region
        // Predicated region
        $region17: #{ugae_forward.1} parent=15 // pred_check
          %p162 = pneg %p33
        $region18: #{ugae_forward.1} parent=15 // pred_check_branch
          %164 = sbr.rel (%p162) target = $region20
        $region19: #{ugae_forward.1} parent=15 // pred_region
          %p165 = scmp.lt.s32.totalorder %s13, 1
          %s166 = scalar_select %p165, %s13, 1
          %s167 = smul.addr %s166, 4
          %s168 = smul.addr %s167, 4
          %s169 = scalar_lea.vmem %s0, %s168
        $region20: #{ugae_forward.1} parent=15 // pred_fallthru
          _
        // Predicated region
        $region21: #{ugae_forward.1} parent=15 // pred_check
          %p170 = pneg %p59
        $region22: #{ugae_forward.1} parent=15 // pred_check_branch
          %172 = sbr.rel (%p170) target = $region24
        $region23: #{ugae_forward.1} parent=15 // pred_region
          %p173 = scmp.lt.s32.totalorder %s13, 1
          %s174 = scalar_select %p173, %s13, 1
          %s175 = smul.addr %s174, 4
          %s176 = smul.addr %s175, 4
          %s177 = scalar_lea.vmem %s1, %s176
        $region24: #{ugae_forward.1} parent=15 // pred_fallthru
          _
        // Predicated region
        $region25: #{ugae_forward.1} parent=15 // pred_check
          %p178 = pneg %p85
        $region26: #{ugae_forward.1} parent=15 // pred_check_branch
          %180 = sbr.rel (%p178) target = $region28
        $region27: #{ugae_forward.1} parent=15 // pred_region
          %p181 = scmp.lt.s32.totalorder %s13, 1
          %s182 = scalar_select %p181, %s13, 1
          %s183 = smul.addr %s182, 16
          %s184 = smul.addr %s183, 4
          %s185 = scalar_lea.vmem %s2, %s184
        $region28: #{ugae_forward.1} parent=15 // pred_fallthru
          _
        // Predicated region
        $region29: #{ugae_forward.1} parent=15 // pred_check
          %p186 = pneg %p111
        $region30: #{ugae_forward.1} parent=15 // pred_check_branch
          %188 = sbr.rel (%p186) target = $region32
        $region31: #{ugae_forward.1} parent=15 // pred_region
          %s189 = sand.u32 %s101, 1
          %s190 = scalar_lea.sflag [#allocation3], %s189
          %s191 = sand.u32 %s101, 1
          %s192 = smul.addr %s191, 64
          %s193 = scalar_lea.vmem [#allocation2], %s192
          %s195 = ssub.s32 1024, 1024
          %196 = vsyncadd %s190, %s195
          %s197 = smul.addr %s13, 16
          %s198 = smul.addr %s197, 64
          %s199 = scalar_lea.hbm %s3, %s198
          %s200 = sshll.u32 %s193, 4
          %s201 = int_to_ptr.vmem [resolvable:$true] %s200
          %206 = dma.hbm_to_vmem [thread:$0]  %s199, 1024, %s201, %s190, 64, 64, 4
        $region32: #{ugae_forward.1} parent=15 // pred_fallthru
          _
      $region16: #{ugae_forward.1} parent=5 // pred_fallthru
        _
      %p207 = scmp.le.s32.totalorder 1, %s13
      %p208 = scmp.lt.s32.totalorder %s13, 3
      %p209 = pnand %p207, %p208
      %p210 = pneg %p209
      // Predicated region
      $region33: #{ugae_forward.1} parent=5 // pred_check
        _
      $region34: #{ugae_forward.1} parent=5 // pred_check_branch
        %212 = sbr.rel (%p209) target = $region36
      $region35: #{ugae_forward.1} parent=5 // pred_region
        %s213 = ssub.s32 %s13, 1
        %s214 = sand.u32 %s104, 1
        %s215 = scalar_lea.sflag [#allocation3], %s214
        %s216 = sand.u32 %s104, 1
        %s217 = smul.addr %s216, 64
        %s218 = scalar_lea.vmem [#allocation2], %s217
        // Predicated region
        $region37: #{ugae_forward.1} parent=35 // pred_check
          %p219 = pneg %p117
        $region38: #{ugae_forward.1} parent=35 // pred_check_branch
          %221 = sbr.rel (%p219) target = $region40
        $region39: #{ugae_forward.1} parent=35 // pred_region
          %222 = dma.done %s215, 1024
        $region40: #{ugae_forward.1} parent=35 // pred_fallthru
          _
        %p223 = scmp.lt.s32.totalorder %s18, 1
        %s224 = scalar_select %p223, %s18, 1
        %s225 = smul.addr %s224, 4
        %s226 = smul.addr %s225, 4
        %s227 = scalar_lea.vmem %s0, %s226
        %p228 = pneg %p39
        %p229 = pneg %p36
        %p230 = scmp.lt.s32.totalorder %s18, 1
        %s231 = scalar_select %p230, %s18, 1
        %s232 = smul.addr %s231, 4
        %s233 = smul.addr %s232, 4
        %s234 = scalar_lea.vmem %s1, %s233
        %p235 = pneg %p65
        %p236 = pneg %p62
        %p237 = scmp.lt.s32.totalorder %s18, 1
        %s238 = scalar_select %p237, %s18, 1
        %s239 = smul.addr %s238, 16
        %s240 = smul.addr %s239, 4
        %s241 = scalar_lea.vmem %s2, %s240
        %p242 = pneg %p91
        %p243 = pneg %p88
        %s244 = sand.u32 %s104, 1
        %s245 = scalar_lea.sflag [#allocation3], %s244
        %s246 = sand.u32 %s104, 1
        %s247 = smul.addr %s246, 64
        %s248 = scalar_lea.vmem [#allocation2], %s247
        %p249 = pneg %p117
        %p250 = pneg %p114
        %p251 = pneg %p143
        %p252 = pneg %p140
        %p253 = scmp.lt.s32.totalorder %s18, 1
        %s254 = scalar_select %p253, %s18, 1
        %s255 = smul.addr %s254, 4
        %s256 = smul.addr %s255, 8
        %s257 = scalar_lea.vmem %s4, %s256
        %p258 = scmp.lt.s32.totalorder %s18, 1
        %s259 = scalar_select %p258, %s18, 1
        %s260 = smul.addr %s259, 4
        %s261 = smul.addr %s260, 4
        %s262 = scalar_lea.vmem %s0, %s261
        %p263 = scmp.lt.s32.totalorder %s18, 1
        %s264 = scalar_select %p263, %s18, 1
        %s265 = smul.addr %s264, 4
        %s266 = smul.addr %s265, 4
        %s267 = scalar_lea.vmem %s1, %s266
        %p268 = scmp.lt.s32.totalorder %s18, 1
        %s269 = scalar_select %p268, %s18, 1
        %s270 = smul.addr %s269, 16
        %s271 = smul.addr %s270, 4
        %s272 = scalar_lea.vmem %s2, %s271
        %p273 = scmp.lt.s32.totalorder %s18, 1
        %s274 = scalar_select %p273, %s18, 1
        %s275 = smul.addr %s274, 4
        %s276 = smul.addr %s275, 8
        %s277 = scalar_lea.vmem %s4, %s276
        %p279 = scmp.eq.s32.totalorder %s18, 0
        %s280 = scalar_select %p279, 5.0, 0.1
        %v281 = vld [vmem:[%s262] sm:$0xf]
        %v282 = vld [vmem:[%s262 + $0x4] sm:$0xf]
        %v283 = vld [vmem:[%s262 + $0x8] sm:$0xf]
        %v284 = vld [vmem:[%s262 + $0xc] sm:$0xf]
        %v285 = vld [vmem:[%s267] sm:$0xf]
        %v286 = vld [vmem:[%s267 + $0x4] sm:$0xf]
        %v287 = vld [vmem:[%s267 + $0x8] sm:$0xf]
        %v288 = vld [vmem:[%s267 + $0xc] sm:$0xf]
        %v289 = vld [vmem:[%s272] sm:$0xf]
        %v290 = vld [vmem:[%s272 + $0x4] sm:$0xf]
        %v291 = vld [vmem:[%s272 + $0x8] sm:$0xf]
        %v292 = vld [vmem:[%s272 + $0xc] sm:$0xf]
        %v293 = vld [vmem:[%s272 + $0x10] sm:$0xf]
        %v294 = vld [vmem:[%s272 + $0x14] sm:$0xf]
        %v295 = vld [vmem:[%s272 + $0x18] sm:$0xf]
        %v296 = vld [vmem:[%s272 + $0x1c] sm:$0xf]
        %v297 = vld [vmem:[%s272 + $0x20] sm:$0xf]
        %v298 = vld [vmem:[%s272 + $0x24] sm:$0xf]
        %v299 = vld [vmem:[%s272 + $0x28] sm:$0xf]
        %v300 = vld [vmem:[%s272 + $0x2c] sm:$0xf]
        %v301 = vld [vmem:[%s272 + $0x30] sm:$0xf]
        %v302 = vld [vmem:[%s272 + $0x34] sm:$0xf]
        %v303 = vld [vmem:[%s272 + $0x38] sm:$0xf]
        %v304 = vld [vmem:[%s272 + $0x3c] sm:$0xf]
        %v305 = vld [vmem:[%s218] sm:$0xf]
        %v306 = vld [vmem:[%s218 + $0x4] sm:$0xf]
        %v307 = vld [vmem:[%s218 + $0x8] sm:$0xf]
        %v308 = vld [vmem:[%s218 + $0xc] sm:$0xf]
        %v309 = vld [vmem:[%s218 + $0x10] sm:$0xf]
        %v310 = vld [vmem:[%s218 + $0x14] sm:$0xf]
        %v311 = vld [vmem:[%s218 + $0x18] sm:$0xf]
        %v312 = vld [vmem:[%s218 + $0x1c] sm:$0xf]
        %v313 = vld [vmem:[%s218 + $0x20] sm:$0xf]
        %v314 = vld [vmem:[%s218 + $0x24] sm:$0xf]
        %v315 = vld [vmem:[%s218 + $0x28] sm:$0xf]
        %v316 = vld [vmem:[%s218 + $0x2c] sm:$0xf]
        %v317 = vld [vmem:[%s218 + $0x30] sm:$0xf]
        %v318 = vld [vmem:[%s218 + $0x34] sm:$0xf]
        %v319 = vld [vmem:[%s218 + $0x38] sm:$0xf]
        %v320 = vld [vmem:[%s218 + $0x3c] sm:$0xf]
        %v325 = vunpack.c.l.b16 %v285
        %v326 = vunpack.c.l.b16 %v286
        %v327 = vunpack.c.l.b16 %v287
        %v328 = vunpack.c.l.b16 %v288
        %v329 = vpack.c.b16 %v326, %v325
        %v330 = vpack.c.b16 %v328, %v327
        %v335 = vunpack.c.l.b16 %v281
        %v336 = vunpack.c.l.b16 %v282
        %v337 = vunpack.c.l.b16 %v283
        %v338 = vunpack.c.l.b16 %v284
        %v339 = vpack.c.b16 %v336, %v335
        %v340 = vpack.c.b16 %v338, %v337
        %vm343 = vcmask 261120
        %v345 = vsel %vm343, %v329, 0
        %v348 = vsel %vm343, %v330, 0
        %350 = vmatprep.subr.bf16.mxu0 0
        %351 = vmatpush1.bf16.msra.mxu0 0
        %352 = vmatprep.subr.bf16.mxu0 0
        %353 = vmatpush1.bf16.msra.mxu0 0
        %354 = vmatprep.subr.bf16.mxu0 0
        %355 = vmatpush1.bf16.msra.mxu0 0
        %356 = vmatprep.subr.bf16.mxu0 0
        %357 = vmatpush1.bf16.msra.mxu0 0
        %358 = vmatprep.subr.bf16.mxu0 0
        %359 = vmatpush1.bf16.msra.mxu0 0
        %360 = vmatprep.subr.bf16.mxu0 0
        %361 = vmatpush1.bf16.msra.mxu0 0
        %362 = vmatprep.subr.bf16.mxu0 0
        %363 = vmatpush1.bf16.msra.mxu0 %v340
        %364 = vmatprep.subr.bf16.mxu0 0
        %365 = vmatpush1.bf16.msra.mxu0 %v339
        %366 = vmatprep.subr.bf16.mxu0 0
        %367 = vmatpush2.bf16.msra.mxu0 0
        %368 = vmatprep.subr.bf16.mxu0 0
        %369 = vmatpush2.bf16.msra.mxu0 0
        %370 = vmatprep.subr.bf16.mxu0 0
        %371 = vmatpush2.bf16.msra.mxu0 0
        %372 = vmatprep.subr.bf16.mxu0 0
        %373 = vmatpush2.bf16.msra.mxu0 0
        %374 = vmatprep.subr.bf16.mxu0 0
        %375 = vmatpush2.bf16.msra.mxu0 0
        %376 = vmatprep.subr.bf16.mxu0 0
        %377 = vmatpush2.bf16.msra.mxu0 0
        %378 = vmatprep.subr.bf16.mxu0 0
        %379 = vmatpush2.bf16.msra.mxu0 0
        %380 = vmatprep.subr.bf16.mxu0 0
        %381 = vmatpush2.bf16.msra.mxu0 0
        %382 = vmatprep.mubr.bf16.mxu0 0
        %383 = vmatmul.mubr.bf16.gmra.mxu0 %v345
        %v384 = vpop.f32.mrf.mxu0
        %v385 = vadd.f32 0.0, %v384
        %v386 = vpop.f32.mrf.mxu0
        %v387 = vpop.f32.mrf.mxu0
        %v388 = vadd.f32 0.0, %v387
        %v389 = vpop.f32.mrf.mxu0
        %390 = vmatprep.mubr.bf16.mxu0 0
        %391 = vmatmul.mubr.bf16.gmra.mxu0 %v348
        %v392 = vpop.f32.mrf.mxu0
        %v393 = vadd.f32 0.0, %v392
        %v394 = vpop.f32.mrf.mxu0
        %v395 = vpop.f32.mrf.mxu0
        %v396 = vadd.f32 0.0, %v395
        %v397 = vpop.f32.mrf.mxu0
        %398 = vdwg.mxu0
        %v399 = vpack.c.bf16 %v388, %v385
        %v400 = vpack.c.bf16 %v396, %v393
        %v417 = vunpack.c.l.b16 %v289
        %v418 = vunpack.c.l.b16 %v290
        %v419 = vunpack.c.l.b16 %v291
        %v420 = vunpack.c.l.b16 %v292
        %v421 = vunpack.c.l.b16 %v293
        %v422 = vunpack.c.l.b16 %v294
        %v423 = vunpack.c.l.b16 %v295
        %v424 = vunpack.c.l.b16 %v296
        %v425 = vunpack.c.l.b16 %v297
        %v426 = vunpack.c.l.b16 %v298
        %v427 = vunpack.c.l.b16 %v299
        %v428 = vunpack.c.l.b16 %v300
        %v429 = vunpack.c.l.b16 %v301
        %v430 = vunpack.c.l.b16 %v302
        %v431 = vunpack.c.l.b16 %v303
        %v432 = vunpack.c.l.b16 %v304
        %v433 = vpack.c.b16 %v418, %v417
        %v434 = vpack.c.b16 %v420, %v419
        %v435 = vpack.c.b16 %v422, %v421
        %v436 = vpack.c.b16 %v424, %v423
        %v437 = vpack.c.b16 %v426, %v425
        %v438 = vpack.c.b16 %v428, %v427
        %v439 = vpack.c.b16 %v430, %v429
        %v440 = vpack.c.b16 %v432, %v431
        %449 = vmatprep.subr.bf16.mxu0 0
        %450 = vmatpush1.bf16.msra.mxu0 %v440
        %451 = vmatprep.subr.bf16.mxu0 0
        %452 = vmatpush1.bf16.msra.mxu0 %v439
        %453 = vmatprep.subr.bf16.mxu0 0
        %454 = vmatpush1.bf16.msra.mxu0 %v438
        %455 = vmatprep.subr.bf16.mxu0 0
        %456 = vmatpush1.bf16.msra.mxu0 %v437
        %457 = vmatprep.subr.bf16.mxu0 0
        %458 = vmatpush1.bf16.msra.mxu0 %v436
        %459 = vmatprep.subr.bf16.mxu0 0
        %460 = vmatpush1.bf16.msra.mxu0 %v435
        %461 = vmatprep.subr.bf16.mxu0 0
        %462 = vmatpush1.bf16.msra.mxu0 %v434
        %463 = vmatprep.subr.bf16.mxu0 0
        %464 = vmatpush1.bf16.msra.mxu0 %v433
        %465 = vmatprep.subr.bf16.mxu0 0
        %466 = vmatpush2.bf16.msra.mxu0 0
        %467 = vmatprep.subr.bf16.mxu0 0
        %468 = vmatpush2.bf16.msra.mxu0 0
        %469 = vmatprep.subr.bf16.mxu0 0
        %470 = vmatpush2.bf16.msra.mxu0 0
        %471 = vmatprep.subr.bf16.mxu0 0
        %472 = vmatpush2.bf16.msra.mxu0 0
        %473 = vmatprep.subr.bf16.mxu0 0
        %474 = vmatpush2.bf16.msra.mxu0 0
        %475 = vmatprep.subr.bf16.mxu0 0
        %476 = vmatpush2.bf16.msra.mxu0 0
        %477 = vmatprep.subr.bf16.mxu0 0
        %478 = vmatpush2.bf16.msra.mxu0 0
        %479 = vmatprep.subr.bf16.mxu0 0
        %480 = vmatpush2.bf16.msra.mxu0 0
        %481 = vmatprep.mubr.bf16.mxu0 0
        %482 = vmatmul.mubr.bf16.gmra.mxu0 %v399
        %v483 = vpop.f32.mrf.mxu0
        %v484 = vadd.f32 0.0, %v483
        %v485 = vpop.f32.mrf.mxu0
        %v486 = vpop.f32.mrf.mxu0
        %v487 = vadd.f32 0.0, %v486
        %v488 = vpop.f32.mrf.mxu0
        %489 = vmatprep.mubr.bf16.mxu0 0
        %490 = vmatmul.mubr.bf16.gmra.mxu0 %v400
        %v491 = vpop.f32.mrf.mxu0
        %v492 = vadd.f32 0.0, %v491
        %v493 = vpop.f32.mrf.mxu0
        %v494 = vpop.f32.mrf.mxu0
        %v495 = vadd.f32 0.0, %v494
        %v496 = vpop.f32.mrf.mxu0
        %497 = vdwg.mxu0
        %v498 = vmax.f32 %v484, 0.0
        %v499 = vmax.f32 %v487, 0.0
        %v500 = vmax.f32 %v492, 0.0
        %v501 = vmax.f32 %v495, 0.0
        %v502 = vpack.c.bf16 %v499, %v498
        %v503 = vpack.c.bf16 %v501, %v500
        %v520 = vunpack.c.l.b16 %v305
        %v521 = vunpack.c.l.b16 %v306
        %v522 = vunpack.c.l.b16 %v307
        %v523 = vunpack.c.l.b16 %v308
        %v524 = vunpack.c.l.b16 %v309
        %v525 = vunpack.c.l.b16 %v310
        %v526 = vunpack.c.l.b16 %v311
        %v527 = vunpack.c.l.b16 %v312
        %v528 = vunpack.c.l.b16 %v313
        %v529 = vunpack.c.l.b16 %v314
        %v530 = vunpack.c.l.b16 %v315
        %v531 = vunpack.c.l.b16 %v316
        %v532 = vunpack.c.l.b16 %v317
        %v533 = vunpack.c.l.b16 %v318
        %v534 = vunpack.c.l.b16 %v319
        %v535 = vunpack.c.l.b16 %v320
        %v536 = vpack.c.b16 %v521, %v520
        %v537 = vpack.c.b16 %v523, %v522
        %v538 = vpack.c.b16 %v525, %v524
        %v539 = vpack.c.b16 %v527, %v526
        %v540 = vpack.c.b16 %v529, %v528
        %v541 = vpack.c.b16 %v531, %v530
        %v542 = vpack.c.b16 %v533, %v532
        %v543 = vpack.c.b16 %v535, %v534
        %552 = vmatprep.subr.bf16.mxu0 0
        %553 = vmatpush1.bf16.msra.mxu0 %v543
        %554 = vmatprep.subr.bf16.mxu0 0
        %555 = vmatpush1.bf16.msra.mxu0 %v542
        %556 = vmatprep.subr.bf16.mxu0 0
        %557 = vmatpush1.bf16.msra.mxu0 %v541
        %558 = vmatprep.subr.bf16.mxu0 0
        %559 = vmatpush1.bf16.msra.mxu0 %v540
        %560 = vmatprep.subr.bf16.mxu0 0
        %561 = vmatpush1.bf16.msra.mxu0 %v539
        %562 = vmatprep.subr.bf16.mxu0 0
        %563 = vmatpush1.bf16.msra.mxu0 %v538
        %564 = vmatprep.subr.bf16.mxu0 0
        %565 = vmatpush1.bf16.msra.mxu0 %v537
        %566 = vmatprep.subr.bf16.mxu0 0
        %567 = vmatpush1.bf16.msra.mxu0 %v536
        %568 = vmatprep.subr.bf16.mxu0 0
        %569 = vmatpush2.bf16.msra.mxu0 0
        %570 = vmatprep.subr.bf16.mxu0 0
        %571 = vmatpush2.bf16.msra.mxu0 0
        %572 = vmatprep.subr.bf16.mxu0 0
        %573 = vmatpush2.bf16.msra.mxu0 0
        %574 = vmatprep.subr.bf16.mxu0 0
        %575 = vmatpush2.bf16.msra.mxu0 0
        %576 = vmatprep.subr.bf16.mxu0 0
        %577 = vmatpush2.bf16.msra.mxu0 0
        %578 = vmatprep.subr.bf16.mxu0 0
        %579 = vmatpush2.bf16.msra.mxu0 0
        %580 = vmatprep.subr.bf16.mxu0 0
        %581 = vmatpush2.bf16.msra.mxu0 0
        %582 = vmatprep.subr.bf16.mxu0 0
        %583 = vmatpush2.bf16.msra.mxu0 0
        %584 = vmatprep.mubr.bf16.mxu0 0
        %585 = vmatmul.mubr.bf16.gmra.mxu0 %v502
        %v586 = vpop.f32.mrf.mxu0
        %v587 = vadd.f32 0.0, %v586
        %v588 = vpop.f32.mrf.mxu0
        %v589 = vpop.f32.mrf.mxu0
        %v590 = vadd.f32 0.0, %v589
        %v591 = vpop.f32.mrf.mxu0
        %592 = vmatprep.mubr.bf16.mxu0 0
        %593 = vmatmul.mubr.bf16.gmra.mxu0 %v503
        %v594 = vpop.f32.mrf.mxu0
        %v595 = vadd.f32 0.0, %v594
        %v596 = vpop.f32.mrf.mxu0
        %v597 = vpop.f32.mrf.mxu0
        %v598 = vadd.f32 0.0, %v597
        %v599 = vpop.f32.mrf.mxu0
        %600 = vdwg.mxu0
        %v601 = vpack.c.bf16 %v590, %v587
        %v602 = vpack.c.bf16 %v598, %v595
        %603 = vmatprep.subr.bf16.mxu0 0
        %604 = vmatpush1.bf16.msra.mxu0 0
        %605 = vmatprep.subr.bf16.mxu0 0
        %606 = vmatpush1.bf16.msra.mxu0 0
        %607 = vmatprep.subr.bf16.mxu0 0
        %608 = vmatpush1.bf16.msra.mxu0 0
        %609 = vmatprep.subr.bf16.mxu0 0
        %610 = vmatpush1.bf16.msra.mxu0 0
        %611 = vmatprep.subr.bf16.mxu0 0
        %612 = vmatpush1.bf16.msra.mxu0 0
        %613 = vmatprep.subr.bf16.mxu0 0
        %614 = vmatpush1.bf16.msra.mxu0 0
        %615 = vmatprep.subr.bf16.mxu0 0
        %616 = vmatpush1.bf16.msra.mxu0 %v602
        %617 = vmatprep.subr.bf16.mxu0 0
        %618 = vmatpush1.bf16.msra.mxu0 %v601
        %619 = vmatprep.subr.bf16.mxu0 0
        %620 = vmatpush2.bf16.msra.mxu0 0
        %621 = vmatprep.subr.bf16.mxu0 0
        %622 = vmatpush2.bf16.msra.mxu0 0
        %623 = vmatprep.subr.bf16.mxu0 0
        %624 = vmatpush2.bf16.msra.mxu0 0
        %625 = vmatprep.subr.bf16.mxu0 0
        %626 = vmatpush2.bf16.msra.mxu0 0
        %627 = vmatprep.subr.bf16.mxu0 0
        %628 = vmatpush2.bf16.msra.mxu0 0
        %629 = vmatprep.subr.bf16.mxu0 0
        %630 = vmatpush2.bf16.msra.mxu0 0
        %631 = vmatprep.subr.bf16.mxu0 0
        %632 = vmatpush2.bf16.msra.mxu0 0
        %633 = vmatprep.subr.bf16.mxu0 0
        %634 = vmatpush2.bf16.msra.mxu0 0
        %635 = vmatprep.mubr.bf16.mxu0 0
        %636 = vmatmul.mubr.bf16.gmra.mxu0 %v345
        %v637 = vpop.f32.mrf.mxu0
        %v638 = vadd.f32 0.0, %v637
        %v639 = vpop.f32.mrf.mxu0
        %v640 = vpop.f32.mrf.mxu0
        %v641 = vadd.f32 0.0, %v640
        %v642 = vpop.f32.mrf.mxu0
        %643 = vmatprep.mubr.bf16.mxu0 0
        %644 = vmatmul.mubr.bf16.gmra.mxu0 %v348
        %v645 = vpop.f32.mrf.mxu0
        %v646 = vadd.f32 0.0, %v645
        %v647 = vpop.f32.mrf.mxu0
        %v648 = vpop.f32.mrf.mxu0
        %v649 = vadd.f32 0.0, %v648
        %v650 = vpop.f32.mrf.mxu0
        %651 = vdwg.mxu0
        %v652 = vmul.f32 %v638, %v638
        %v653 = vmul.f32 %v641, %v641
        %v654 = vmul.f32 %v646, %v646
        %v655 = vmul.f32 %v649, %v649
        %656 = vadd.xlane.f32.xlu0 %v652
        %v657 = vpop.xlane.xlu0 %656
        %658 = vadd.xlane.f32.xlu0 %v653
        %v659 = vpop.xlane.xlu0 %658
        %660 = vadd.xlane.f32.xlu0 %v654
        %v661 = vpop.xlane.xlu0 %660
        %662 = vadd.xlane.f32.xlu0 %v655
        %v663 = vpop.xlane.xlu0 %662
        %v664 = vadd.f32 %v657, 1e-12
        %v665 = vadd.f32 %v659, 1e-12
        %v666 = vadd.f32 %v661, 1e-12
        %v667 = vadd.f32 %v663, 1e-12
        %v668 = vrsqrt.pop %v664
        %v669 = vrsqrt.pop %v665
        %v670 = vrsqrt.pop %v666
        %v671 = vrsqrt.pop %v667
        %v672 = vmul.f32 %v638, %v668
        %v673 = vmul.f32 %v641, %v669
        %v674 = vmul.f32 %v646, %v670
        %v675 = vmul.f32 %v649, %v671
        %676 = vmatprep.subr.mxu0 0.0
        %677 = vmatpush1.xpose.msra.mxu0 0.0
        %678 = vmatprep.subr.mxu0 0.0
        %679 = vmatpush1.xpose.msra.mxu0 0.0
        %680 = vmatprep.subr.mxu0 0.0
        %681 = vmatpush1.xpose.msra.mxu0 0.0
        %682 = vmatprep.subr.mxu0 0.0
        %683 = vmatpush1.xpose.msra.mxu0 0.0
        %684 = vmatprep.subr.mxu0 0.0
        %685 = vmatpush1.xpose.msra.mxu0 0.0
        %686 = vmatprep.subr.mxu0 0.0
        %687 = vmatpush1.xpose.msra.mxu0 0.0
        %688 = vmatprep.subr.mxu0 0.0
        %689 = vmatpush1.xpose.msra.mxu0 0.0
        %690 = vmatprep.subr.mxu0 0.0
        %691 = vmatpush1.xpose.msra.mxu0 0.0
        %692 = vmatprep.subr.mxu0 0.0
        %693 = vmatpush1.xpose.msra.mxu0 0.0
        %694 = vmatprep.subr.mxu0 0.0
        %695 = vmatpush1.xpose.msra.mxu0 0.0
        %696 = vmatprep.subr.mxu0 0.0
        %697 = vmatpush1.xpose.msra.mxu0 0.0
        %698 = vmatprep.subr.mxu0 0.0
        %699 = vmatpush1.xpose.msra.mxu0 0.0
        %700 = vmatprep.subr.mxu0 0.0
        %701 = vmatpush1.xpose.msra.mxu0 %v675
        %702 = vmatprep.subr.mxu0 0.0
        %703 = vmatpush1.xpose.msra.mxu0 %v674
        %704 = vmatprep.subr.mxu0 0.0
        %705 = vmatpush1.xpose.msra.mxu0 %v673
        %706 = vmatprep.subr.mxu0 0.0
        %707 = vmatpush1.xpose.msra.mxu0 %v672
        %708 = vmatprep.subr.mxu0 0.0
        %709 = vmatpush2.xpose.msra.mxu0 0.0
        %710 = vmatprep.subr.mxu0 0.0
        %711 = vmatpush2.xpose.msra.mxu0 0.0
        %712 = vmatprep.subr.mxu0 0.0
        %713 = vmatpush2.xpose.msra.mxu0 0.0
        %714 = vmatprep.subr.mxu0 0.0
        %715 = vmatpush2.xpose.msra.mxu0 0.0
        %716 = vmatprep.subr.mxu0 0.0
        %717 = vmatpush2.xpose.msra.mxu0 0.0
        %718 = vmatprep.subr.mxu0 0.0
        %719 = vmatpush2.xpose.msra.mxu0 0.0
        %720 = vmatprep.subr.mxu0 0.0
        %721 = vmatpush2.xpose.msra.mxu0 0.0
        %722 = vmatprep.subr.mxu0 0.0
        %723 = vmatpush2.xpose.msra.mxu0 0.0
        %724 = vmatprep.subr.mxu0 0.0
        %725 = vmatpush2.xpose.msra.mxu0 0.0
        %726 = vmatprep.subr.mxu0 0.0
        %727 = vmatpush2.xpose.msra.mxu0 0.0
        %728 = vmatprep.subr.mxu0 0.0
        %729 = vmatpush2.xpose.msra.mxu0 0.0
        %730 = vmatprep.subr.mxu0 0.0
        %731 = vmatpush2.xpose.msra.mxu0 0.0
        %732 = vmatprep.subr.mxu0 0.0
        %733 = vmatpush2.xpose.msra.mxu0 0.0
        %734 = vmatprep.subr.mxu0 0.0
        %735 = vmatpush2.xpose.msra.mxu0 0.0
        %736 = vmatprep.subr.mxu0 0.0
        %737 = vmatpush2.xpose.msra.mxu0 0.0
        %738 = vmatprep.subr.mxu0 0.0
        %739 = vmatpush2.xpose.msra.mxu0 0.0
        %740 = vmatprep.mubr.f32.mxu0 0.0
        %741 = vmatmul.mubr.f32.gmra.mxu0 %v672
        %v742 = vpop.f32.mrf.mxu0
        %v743 = vadd.f32 0.0, %v742
        %v744 = vpop.f32.mrf.mxu0
        %745 = vmatprep.mubr.f32.mxu0 0.0
        %746 = vmatmul.mubr.f32.gmra.mxu0 %v673
        %v747 = vpop.f32.mrf.mxu0
        %v748 = vadd.f32 0.0, %v747
        %v749 = vpop.f32.mrf.mxu0
        %750 = vmatprep.mubr.f32.mxu0 0.0
        %751 = vmatmul.mubr.f32.gmra.mxu0 %v674
        %v752 = vpop.f32.mrf.mxu0
        %v753 = vadd.f32 0.0, %v752
        %v754 = vpop.f32.mrf.mxu0
        %755 = vmatprep.mubr.f32.mxu0 0.0
        %756 = vmatmul.mubr.f32.gmra.mxu0 %v675
        %v757 = vpop.f32.mrf.mxu0
        %v758 = vadd.f32 0.0, %v757
        %v759 = vpop.f32.mrf.mxu0
        %760 = vdwg.mxu0
        %v761 = vstv %s280
        %v762 = vmul.f32 %v761, %v743
        %v763 = vmul.f32 %v761, %v748
        %v764 = vmul.f32 %v761, %v753
        %v765 = vmul.f32 %v761, %v758
        %v766 = vxor.u32 %v762, 2147483648
        %v767 = vxor.u32 %v763, 2147483648
        %v768 = vxor.u32 %v764, 2147483648
        %v769 = vxor.u32 %v765, 2147483648
        %v770 = vmul.f32 %v766, 1.442695
        %v771 = vpow.pop %v770
        %v772 = vmul.f32 %v767, 1.442695
        %v773 = vpow.pop %v772
        %v774 = vmul.f32 %v768, 1.442695
        %v775 = vpow.pop %v774
        %v776 = vmul.f32 %v769, 1.442695
        %v777 = vpow.pop %v776
        %v778 = vadd.f32 %v771, 1.0
        %v779 = vadd.f32 %v773, 1.0
        %v780 = vadd.f32 %v775, 1.0
        %v781 = vadd.f32 %v777, 1.0
        %v782 = vrcp.pop %v778
        %v783 = vmul.f32 1.0, %v782
        %v784 = vrcp.pop %v779
        %v785 = vmul.f32 1.0, %v784
        %v786 = vrcp.pop %v780
        %v787 = vmul.f32 1.0, %v786
        %v788 = vrcp.pop %v781
        %v789 = vmul.f32 1.0, %v788
        %790 = vst.msk [vmem:[%s277] sm:$0xff] %vm343, %v783
        %791 = vst.msk [vmem:[%s277 + $0x8] sm:$0xff] %vm343, %v785
        %792 = vst.msk [vmem:[%s277 + $0x10] sm:$0xff] %vm343, %v787
        %793 = vst.msk [vmem:[%s277 + $0x18] sm:$0xff] %vm343, %v789
        %p794 = scmp.lt.s32.totalorder %s18, 1
        %s795 = scalar_select %p794, %s18, 1
        %s796 = smul.addr %s795, 4
        %s797 = smul.addr %s796, 8
        %s798 = scalar_lea.vmem %s4, %s797
        // Predicated region
        $region41: #{ugae_forward.1} parent=35 // pred_check
          %p799 = pneg %p140
        $region42: #{ugae_forward.1} parent=35 // pred_check_branch
          %801 = sbr.rel (%p799) target = $region44
        $region43: #{ugae_forward.1} parent=35 // pred_region
          _
        $region44: #{ugae_forward.1} parent=35 // pred_fallthru
          _
      $region36: #{ugae_forward.1} parent=5 // pred_fallthru
        _
      %p802 = scmp.le.s32.totalorder 2, %s13
      // Predicated region
      $region45: #{ugae_forward.1} parent=5 // pred_check
        %p803 = pneg %p802
      $region46: #{ugae_forward.1} parent=5 // pred_check_branch
        %805 = sbr.rel (%p803) target = $region48
      $region47: #{ugae_forward.1} parent=5 // pred_region
        %s806 = ssub.s32 %s13, 2
        // Predicated region
        $region49: #{ugae_forward.1} parent=47 // pred_check
          %p807 = pneg %p146
        $region50: #{ugae_forward.1} parent=47 // pred_check_branch
          %809 = sbr.rel (%p807) target = $region52
        $region51: #{ugae_forward.1} parent=47 // pred_region
          %p810 = scmp.lt.s32.totalorder %s19, 1
          %s811 = scalar_select %p810, %s19, 1
          %s812 = smul.addr %s811, 4
          %s813 = smul.addr %s812, 8
          %s814 = scalar_lea.vmem %s4, %s813
        $region52: #{ugae_forward.1} parent=47 // pred_fallthru
          _
      $region48: #{ugae_forward.1} parent=5 // pred_fallthru
        _
    $region6: #{ugae_forward.1} parent=1 // loop_footer
      %s17 = sadd.s32 1, %s13
    $region7: #{ugae_forward.1} parent=1 // loop_footer_branch
      %12 = sbr.rel target = $region3
    $region8: #{ugae_forward.1} parent=1 // loop_exit
      _
    %815 = vsyncpa [#allocation3], 1
    %s816 = scalar_lea.sflag [#allocation3], 1
    %817 = vsyncpa %s816, 1

</llo_original>
